<compile_context>
chip_gen: v7x
topology: tpu7x:2x2x1
jax: 0.10.0
libtpu: 0.0.40
codegen_flags: <defaults>
</compile_context>

<pallas_src>
import functools

import jax
import jax.numpy as jnp
from jax import lax
from jax.experimental import pallas as pl
from jax.experimental.pallas import tpu as pltpu


def _contrastive_loss_kernel(x1_ref, x2_ref, label_ref, out_ref, *,
                             margin, eps, batch, block_rows):
    i = pl.program_id(0)

    # Tiles stay in their narrow HBM dtype; cast to f32 for the math.
    x1 = x1_ref[...].astype(jnp.float32)        # (TB, D)
    x2 = x2_ref[...].astype(jnp.float32)        # (TB, D)
    lab = label_ref[...].astype(jnp.float32)    # (TB, 1)

    # Per-row reductions over the feature axis.
    dot = jnp.sum(x1 * x2, axis=1, keepdims=True)   # (TB, 1)
    ss1 = jnp.sum(x1 * x1, axis=1, keepdims=True)   # (TB, 1)
    ss2 = jnp.sum(x2 * x2, axis=1, keepdims=True)   # (TB, 1)

    # cos = dot / max(||x1||*||x2||, eps) == dot * rsqrt(max(ss1*ss2, eps^2))
    # (single EUP rsqrt; sqrt is monotone so the eps clamp is equivalent).
    cos = dot * lax.rsqrt(jnp.maximum(ss1 * ss2, eps * eps))
    dist = 1.0 - cos
    hinge = jnp.maximum(margin - dist, 0.0)
    per_example = lab * (dist * dist) + (1.0 - lab) * (hinge * hinge)  # (TB, 1)

    # Mask rows of the (possibly ragged, unpadded) boundary tile. jnp.where is a
    # select, so NaN/garbage from out-of-bounds rows cannot leak into the sum.
    rows = lax.broadcasted_iota(jnp.int32, per_example.shape, 0)
    valid = (i * block_rows + rows) < batch
    per_example = jnp.where(valid, per_example, 0.0)

    # Per-block partial sum, written lane-dense (1, 1, 128). Each grid step owns
    # a distinct output block, so the batch axis can be sharded "parallel".
    partial = jnp.sum(per_example)
    out_ref[...] = jnp.broadcast_to(partial, out_ref.shape).astype(out_ref.dtype)


def _round_up(x, m):
    return (x + m - 1) // m * m


def _vmem_capacity_bytes():
    # Chip-aware scoped-VMEM capacity (128 MiB on v5e/v6e, 64 MiB/TC on v7x).
    try:
        return int(pltpu.get_tpu_info().vmem_capacity_bytes)
    except Exception:
        return 64 * 1024 * 1024  # conservative fallback (v7x per-TC)


def _pick_block_rows(batch, feat, itemsize, budget_bytes):
    """Largest row tile whose lane-padded VMEM footprint fits the budget."""
    d_pad = _round_up(max(feat, 1), 128)  # VMEM tiles are 128-lane padded
    per_row = (
        2 * 2 * d_pad * itemsize    # x1, x2: 2 inputs x 2 pipeline buffers
        + 3 * d_pad * 4             # live f32 working copies / products
        + 2 * 128 * 4               # (TB,1) label tile, 2 buffers, lane-padded f32
        + 8 * 128 * 4               # per-row stats (dot/ss1/ss2/cos/dist/hinge/...)
    )
    tb = budget_bytes // per_row
    tb = min(tb, _round_up(batch, 8))
    tb = max(8, (tb // 8) * 8)
    return int(tb)


def contrastive_loss(output1, output2, label, margin=1.0, eps=1e-8, block_rows=None):
    """Pallas TPU forward of ContrastiveLoss.

    output1, output2: [B, D] float arrays (kept in their HBM dtype).
    label:            [B] float array (1 = similar pair, 0 = dissimilar pair).
    Returns a scalar float32 loss.
    """
    assert output1.shape == output2.shape and output1.ndim == 2
    B, D = output1.shape
    itemsize = jnp.dtype(output1.dtype).itemsize

    vmem_cap = _vmem_capacity_bytes()
    # Tile budget: ~1/3 of scoped VMEM, hard-capped so v7x (64 MiB/TC) is safe.
    budget = min(vmem_cap // 3, 40 * 1024 * 1024)
    # Explicit scoped-VMEM limit (v5e default is only 16 MiB), with headroom.
    vmem_limit = max(32 * 1024 * 1024, min(int(vmem_cap * 0.75), 96 * 1024 * 1024))

    if block_rows is None:
        TB = _pick_block_rows(B, D, itemsize, budget)
    else:
        TB = int(block_rows)
        assert TB % 8 == 0, "block_rows must be a multiple of 8"

    num_blocks = -(-B // TB)

    # v7x: make sure the "parallel" batch axis has >= 2 blocks so both
    # TensorCores stream HBM (harmless serial extra step on v5e/v6e).
    if block_rows is None and num_blocks == 1 and B >= 16:
        TB = _round_up(-(-B // 2), 8)
        num_blocks = -(-B // TB)

    label2d = jnp.reshape(label, (B, 1)).astype(jnp.float32)

    kernel = functools.partial(
        _contrastive_loss_kernel,
        margin=float(margin), eps=float(eps), batch=B, block_rows=TB,
    )

    cost = pl.CostEstimate(
        flops=6 * B * D,                 # 3 muls + 3 adds per element
        transcendentals=B,               # one rsqrt per row
        bytes_accessed=2 * B * D * itemsize + B * 4 + num_blocks * 512,
    )

    partials = pl.pallas_call(
        kernel,
        out_shape=jax.ShapeDtypeStruct((num_blocks, 1, 128), jnp.float32),
        grid=(num_blocks,),
        in_specs=[
            pl.BlockSpec((TB, D), lambda i: (i, 0)),
            pl.BlockSpec((TB, D), lambda i: (i, 0)),
            pl.BlockSpec((TB, 1), lambda i: (i, 0)),
        ],
        out_specs=pl.BlockSpec((1, 1, 128), lambda i: (i, 0, 0)),
        compiler_params=pltpu.CompilerParams(
            dimension_semantics=("parallel",),
            vmem_limit_bytes=int(vmem_limit),
        ),
        cost_estimate=cost,
    )(output1, output2, label2d)

    # Final reduction over per-block partial sums in the wrapper (megacore-safe).
    return jnp.sum(partials[:, 0, 0]) / jnp.float32(B)


def _reference(output1, output2, label, margin=1.0, eps=1e-8):
    # Pure-JAX reference mirroring torch semantics.
    o1 = output1.astype(jnp.float32)
    o2 = output2.astype(jnp.float32)
    dot = jnp.sum(o1 * o2, axis=1)
    n1 = jnp.linalg.norm(o1, axis=1)
    n2 = jnp.linalg.norm(o2, axis=1)
    cos = dot / jnp.maximum(n1 * n2, eps)
    dist = 1.0 - cos
    return jnp.mean(
        label * dist**2 + (1.0 - label) * jnp.maximum(margin - dist, 0.0) ** 2
    )


if __name__ == "__main__":
    key = jax.random.PRNGKey(0)
    k1, k2, k3, k4, k5, k6, k7, k8, k9 = jax.random.split(key, 9)

    # Case 1: small [batch, embedding_dim] pair, single block.
    B, D = 8, 32
    o1 = jax.random.normal(k1, (B, D), dtype=jnp.float32)
    o2 = jax.random.normal(k2, (B, D), dtype=jnp.float32)
    lab = jax.random.bernoulli(k3, p=0.5, shape=(B,)).astype(jnp.float32)

    loss = jax.block_until_ready(contrastive_loss(o1, o2, lab, margin=1.0))
    ref = _reference(o1, o2, lab, margin=1.0)
    assert jnp.allclose(loss, ref, atol=1e-5, rtol=1e-4), (loss, ref)

    # Case 2: multi-block grid + ragged (unpadded) last tile with forced TB=8.
    B2, D2 = 20, 128
    o1b = jax.random.normal(k4, (B2, D2), dtype=jnp.float32)
    o2b = jax.random.normal(k5, (B2, D2), dtype=jnp.float32)
    labb = jax.random.bernoulli(k6, p=0.5, shape=(B2,)).astype(jnp.float32)

    loss2 = jax.block_until_ready(
        contrastive_loss(o1b, o2b, labb, margin=1.0, block_rows=8)
    )
    ref2 = _reference(o1b, o2b, labb, margin=1.0)
    assert jnp.allclose(loss2, ref2, atol=1e-5, rtol=1e-4), (loss2, ref2)

    # Case 3: bf16 inputs, auto tile sizing + forced >=2 blocks + ragged boundary.
    B3, D3 = 300, 256
    o1c = jax.random.normal(k7, (B3, D3), dtype=jnp.bfloat16)
    o2c = jax.random.normal(k8, (B3, D3), dtype=jnp.bfloat16)
    labc = jax.random.bernoulli(k9, p=0.5, shape=(B3,)).astype(jnp.float32)

    loss3 = jax.block_until_ready(contrastive_loss(o1c, o2c, labc, margin=1.0))
    ref3 = _reference(o1c, o2c, labc, margin=1.0)
    assert jnp.allclose(loss3, ref3, atol=1e-4, rtol=1e-3), (loss3, ref3)

    print("KERNEL_OK")
</pallas_src>

<mosaic_0001>
module attributes {stable_mosaic.version = 11 : i64} {
  func.func @_contrastive_loss_kernel(%arg0: i32, %arg1: memref<8x32xf32, #tpu.memory_space<vmem>>, %arg2: memref<8x32xf32, #tpu.memory_space<vmem>>, %arg3: memref<8x1xf32, #tpu.memory_space<vmem>>, %arg4: memref<1x1x128xf32, #tpu.memory_space<vmem>>) attributes {dimension_semantics = [#tpu.dimension_semantics<parallel>], iteration_bounds = array<i64: 1>, scalar_prefetch = 0 : i64, scratch_operands = 0 : i64, tpu.core_type = #tpu.core_type<tc>, window_params = [{transform_indices = @transform_0, window_bounds = array<i64: 8, 32>}, {transform_indices = @transform_1, window_bounds = array<i64: 8, 32>}, {transform_indices = @transform_2, window_bounds = array<i64: 8, 1>}, {transform_indices = @transform_3, window_bounds = array<i64: 1, 1, 128>}]} {
    %c0 = arith.constant 0 : index
    %c0_0 = arith.constant 0 : index
    %0 = vector.load %arg1[%c0, %c0_0] : memref<8x32xf32, #tpu.memory_space<vmem>>, vector<8x32xf32>
    %c0_1 = arith.constant 0 : index
    %c0_2 = arith.constant 0 : index
    %1 = vector.load %arg2[%c0_1, %c0_2] : memref<8x32xf32, #tpu.memory_space<vmem>>, vector<8x32xf32>
    %c0_3 = arith.constant 0 : index
    %c0_4 = arith.constant 0 : index
    %2 = vector.load %arg3[%c0_3, %c0_4] : memref<8x1xf32, #tpu.memory_space<vmem>>, vector<8x1xf32>
    %3 = arith.mulf %0, %1 : vector<8x32xf32>
    %cst = arith.constant dense<0.000000e+00> : vector<8xf32>
    %4 = vector.multi_reduction <add>, %3, %cst [1] : vector<8x32xf32> to vector<8xf32>
    %5 = vector.shape_cast %4 : vector<8xf32> to vector<8x1xf32>
    %6 = arith.mulf %0, %0 : vector<8x32xf32>
    %cst_5 = arith.constant dense<0.000000e+00> : vector<8xf32>
    %7 = vector.multi_reduction <add>, %6, %cst_5 [1] : vector<8x32xf32> to vector<8xf32>
    %8 = vector.shape_cast %7 : vector<8xf32> to vector<8x1xf32>
    %9 = arith.mulf %1, %1 : vector<8x32xf32>
    %cst_6 = arith.constant dense<0.000000e+00> : vector<8xf32>
    %10 = vector.multi_reduction <add>, %9, %cst_6 [1] : vector<8x32xf32> to vector<8xf32>
    %11 = vector.shape_cast %10 : vector<8xf32> to vector<8x1xf32>
    %12 = arith.mulf %8, %11 : vector<8x1xf32>
    %cst_7 = arith.constant 1.000000e-16 : f32
    %13 = vector.broadcast %cst_7 : f32 to vector<8x1xf32>
    %14 = arith.maximumf %12, %13 : vector<8x1xf32>
    %15 = math.rsqrt %14 : vector<8x1xf32>
    %16 = arith.mulf %5, %15 : vector<8x1xf32>
    %cst_8 = arith.constant 1.000000e+00 : f32
    %17 = vector.broadcast %cst_8 : f32 to vector<8x1xf32>
    %18 = arith.subf %17, %16 : vector<8x1xf32>
    %cst_9 = arith.constant 1.000000e+00 : f32
    %19 = vector.broadcast %cst_9 : f32 to vector<8x1xf32>
    %20 = arith.subf %19, %18 : vector<8x1xf32>
    %cst_10 = arith.constant 0.000000e+00 : f32
    %21 = vector.broadcast %cst_10 : f32 to vector<8x1xf32>
    %22 = arith.maximumf %20, %21 : vector<8x1xf32>
    %23 = arith.mulf %18, %18 : vector<8x1xf32>
    %24 = arith.mulf %2, %23 : vector<8x1xf32>
    %cst_11 = arith.constant 1.000000e+00 : f32
    %25 = vector.broadcast %cst_11 : f32 to vector<8x1xf32>
    %26 = arith.subf %25, %2 : vector<8x1xf32>
    %27 = arith.mulf %22, %22 : vector<8x1xf32>
    %28 = arith.mulf %26, %27 : vector<8x1xf32>
    %29 = arith.addf %24, %28 : vector<8x1xf32>
    %30 = tpu.iota {dimensions = array<i32: 0>} : vector<8x1xi32>
    %c8_i32 = arith.constant 8 : i32
    %31 = arith.muli %arg0, %c8_i32 : i32
    %32 = vector.broadcast %31 : i32 to vector<8x1xi32>
    %33 = arith.addi %32, %30 : vector<8x1xi32>
    %c8_i32_12 = arith.constant 8 : i32
    %34 = vector.broadcast %c8_i32_12 : i32 to vector<8x1xi32>
    %35 = arith.cmpi slt, %33, %34 : vector<8x1xi32>
    %cst_13 = arith.constant 0.000000e+00 : f32
    %36 = vector.broadcast %cst_13 : f32 to vector<8x1xf32>
    %37 = arith.select %35, %29, %36 : vector<8x1xi1>, vector<8x1xf32>
    %38 = vector.shape_cast %37 : vector<8x1xf32> to vector<1x8x1xf32>
    %cst_14 = arith.constant dense<0.000000e+00> : vector<1xf32>
    %39 = vector.multi_reduction <add>, %38, %cst_14 [1, 2] : vector<1x8x1xf32> to vector<1xf32>
    %40 = vector.shape_cast %39 : vector<1xf32> to vector<1x1x1xf32>
    %41 = vector.extract %40[0, 0, 0] : f32 from vector<1x1x1xf32>
    %42 = vector.broadcast %41 : f32 to vector<1x1x128xf32>
    %c0_15 = arith.constant 0 : index
    %c0_16 = arith.constant 0 : index
    %c0_17 = arith.constant 0 : index
    %43 = vector.load %arg4[%c0_15, %c0_16, %c0_17] : memref<1x1x128xf32, #tpu.memory_space<vmem>>, vector<1x1x128xf32>
    tpu.vector_store %arg4[%c0_15, %c0_16, %c0_17], %42 {strides = array<i32>} : memref<1x1x128xf32, #tpu.memory_space<vmem>>, vector<1x1x128xf32>,
    return
  }
  func.func @transform_0(%arg0: i32) -> (i32, i32) {
    %c0_i32 = arith.constant 0 : i32
    %c0_i32_0 = arith.constant 0 : i32
    return %arg0, %c0_i32 : i32, i32
  }
  func.func @transform_1(%arg0: i32) -> (i32, i32) {
    %c0_i32 = arith.constant 0 : i32
    %c0_i32_0 = arith.constant 0 : i32
    return %arg0, %c0_i32 : i32, i32
  }
  func.func @transform_2(%arg0: i32) -> (i32, i32) {
    %c0_i32 = arith.constant 0 : i32
    %c0_i32_0 = arith.constant 0 : i32
    return %arg0, %c0_i32 : i32, i32
  }
  func.func @transform_3(%arg0: i32) -> (i32, i32, i32) {
    %c0_i32 = arith.constant 0 : i32
    %c0_i32_0 = arith.constant 0 : i32
    %c0_i32_1 = arith.constant 0 : i32
    return %arg0, %c0_i32, %c0_i32_0 : i32, i32, i32
  }
}

</mosaic_0001>

<llo_original>
// kernel: tpu_custom_call.1
$region0: #{tpu_custom_call.1}
  #allocation0 [shape = 'u32[]', space=smem, size = 0x4, offset = 0x4, fixed_abs, tag = 'smem constant byte address 0x4 - core index']
  #allocation1 [shape = 'u32[144,128]{1,0:T(1,128)}', space=vmem, size = 0x12000, scoped, tag = 'internal scratch']
  %s0 = inlined_call_operand.vmem [shape: f32[8,32], index: 0, kind: input, shape index: {}]
  %s1 = inlined_call_operand.hbm [shape: f32[8,32], index: 1, kind: input, shape index: {}]
  %s2 = inlined_call_operand.vmem [shape: f32[8,1], index: 2, kind: input, shape index: {}]
  %s3 = inlined_call_operand.hbm [shape: f32[1,1,128], index: 3, kind: output, shape index: {}]
  %s4 = sld [smem:[#allocation0]]
  $region26: #{tpu_custom_call.1} parent=0
    _
  %s6 = ssub.s32 1, %s4
  %s7 = scalar_select 0, %s6, %s4
  $region1: #{tpu_custom_call.1} parent=0
    #allocation2 [shape = 'u8[4096]{0}', space=vmem, size = 0x1000, scoped, tag = 'input window, operand 1, single buffered']
    #allocation3 [shape = 's32[1]{0}', space=sflag, size = 0x4, scoped, tag = 'scoped memory for tpu_custom_call.1']
    #allocation4 [shape = 's32[1]{0}', space=sflag, size = 0x4, scoped, tag = 'scoped memory for tpu_custom_call.1']
    #allocation5 [shape = 'u8[512]{0}', space=vmem, size = 0x400, scoped, tag = 'output window, operand 0, single buffered']
    %8 = vsyncpa [#allocation3], 0
    %9 = vsyncpa [#allocation4], 0
    // Predicated region
    $region2: #{tpu_custom_call.1} parent=1 // pred_check
      _
    $region3: #{tpu_custom_call.1} parent=1 // pred_check_branch
      %11 = sbr.rel (0) target = $region5
    $region4: #{tpu_custom_call.1} parent=1 // pred_region
      _
    $region5: #{tpu_custom_call.1} parent=1 // pred_fallthru
      _
    // Predicated region
    $region6: #{tpu_custom_call.1} parent=1 // pred_check
      _
    $region7: #{tpu_custom_call.1} parent=1 // pred_check_branch
      %13 = sbr.rel (0) target = $region9
    $region8: #{tpu_custom_call.1} parent=1 // pred_region
      %s15 = ssub.s32 128, 128
      %16 = vsyncadd [#allocation3], %s15
      %s18 = sshll.u32 [#allocation2], 4
      %s19 = int_to_ptr.vmem [resolvable:$true] %s18
      %21 = dma.hbm_to_vmem [thread:$0]  %s1, 128, %s19, [#allocation3]
    $region9: #{tpu_custom_call.1} parent=1 // pred_fallthru
      _
    // Predicated region
    $region10: #{tpu_custom_call.1} parent=1 // pred_check
      _
    $region11: #{tpu_custom_call.1} parent=1 // pred_check_branch
      %23 = sbr.rel (0) target = $region13
    $region12: #{tpu_custom_call.1} parent=1 // pred_region
      _
    $region13: #{tpu_custom_call.1} parent=1 // pred_fallthru
      _
    // Predicated region
    $region14: #{tpu_custom_call.1} parent=1 // pred_check
      _
    $region15: #{tpu_custom_call.1} parent=1 // pred_check_branch
      %25 = sbr.rel (0) target = $region17
    $region16: #{tpu_custom_call.1} parent=1 // pred_region
      %26 = dma.done [#allocation3], 128
    $region17: #{tpu_custom_call.1} parent=1 // pred_fallthru
      _
    %v27 = vld [vmem:[%s0] sm:$0xff]
    %v28 = vld [vmem:[#allocation2] sm:$0xff]
    %v29 = vld [vmem:[%s2] sm:$0xff]
    %v30 = vmul.f32 %v27, %v28
    %vm31 = vcmask 261120
    %v32 = vsel %vm31, %v30, 0.0
    %33 = vadd.xlane.f32.xlu0 %v32
    %v34 = vpop.xlane.xlu0 %33
    %v35 = vmul.f32 %v27, %v27
    %v36 = vsel %vm31, %v35, 0.0
    %37 = vadd.xlane.f32.xlu0 %v36
    %v38 = vpop.xlane.xlu0 %37
    %v39 = vmul.f32 %v28, %v28
    %v40 = vsel %vm31, %v39, 0.0
    %41 = vadd.xlane.f32.xlu0 %v40
    %v42 = vpop.xlane.xlu0 %41
    %v43 = vmul.f32 %v38, %v42
    %v44 = vmax.f32 %v43, 1e-16
    %v45 = vrsqrt.pop %v44
    %v46 = vmul.f32 %v34, %v45
    %v47 = vsub.f32 1.0, %v46
    %v48 = vsub.f32 1.0, %v47
    %v49 = vmax.f32 %v48, 0.0
    %v50 = vmul.f32 %v47, %v47
    %v51 = vmul.f32 %v29, %v50
    %v52 = vsub.f32 1.0, %v29
    %v53 = vmul.f32 %v49, %v49
    %v54 = vmul.f32 %v52, %v53
    %v55 = vadd.f32 %v51, %v54
    %v56 = vlaneseq
    %v57 = vshrl.u32 %v56, 7
    %s58 = smul.u32 0, 8
    %v59 = vstv %s58
    %v60 = vadd.s32 %v59, %v57
    %vm61 = vcmp.lt.s32.totalorder %v60, 8
    %v62 = vsel %vm61, %v55, 0.0
    %vm63 = vcmask 7168
    %v64 = vsel %vm63, %v62, 0.0
    %65 = vadd.xlane.f32.xlu0 %v64
    %v66 = vpop.xlane.xlu0 %65
    %v67 = vrot.slane %v66, 4
    %v68 = vadd.f32 %v66, %v67
    %v69 = vrot.slane %v68, 2
    %v70 = vadd.f32 %v68, %v69
    %v71 = vrot.slane %v70, 1
    %v72 = vadd.f32 %v70, %v71
    %s73 = vtos %v72
    %v74 = vstv %s73
    %75 = vst [vmem:[#allocation5] sm:$0x1] %v74
    // Predicated region
    $region18: #{tpu_custom_call.1} parent=1 // pred_check
      _
    $region19: #{tpu_custom_call.1} parent=1 // pred_check_branch
      %77 = sbr.rel (0) target = $region21
    $region20: #{tpu_custom_call.1} parent=1 // pred_region
      %s79 = ssub.s32 16, 16
      %80 = vsyncadd [#allocation4], %s79
      %s82 = sshll.u32 [#allocation5], 4
      %s83 = int_to_ptr.vmem [resolvable:$true] %s82
      %85 = dma.vmem_to_hbm [thread:$0]  %s83, 16, %s3, [#allocation4]
    $region21: #{tpu_custom_call.1} parent=1 // pred_fallthru
      _
    // Predicated region
    $region22: #{tpu_custom_call.1} parent=1 // pred_check
      _
    $region23: #{tpu_custom_call.1} parent=1 // pred_check_branch
      %87 = sbr.rel (0) target = $region25
    $region24: #{tpu_custom_call.1} parent=1 // pred_region
      %88 = dma.done [#allocation4], 16
    $region25: #{tpu_custom_call.1} parent=1 // pred_fallthru
      _
    %89 = vsyncpa [#allocation3], 1
    %90 = vsyncpa [#allocation4], 1

</llo_original>
